<compile_context>
chip_gen: v5e
topology: v5e:2x2
jax: 0.10.0
libtpu: 0.0.40
codegen_flags: <defaults>
</compile_context>

<pallas_src>
import jax
import jax.numpy as jnp
from jax.experimental import pallas as pl
from jax.experimental.pallas import tpu as pltpu


# ----------------------------- Pallas kernel --------------------------------
def _mlp_kernel(x_ref, w1_ref, b1_ref, w2_ref, b2_ref, o_ref):
    # block 0: nn.Linear(in, hidden)  — bf16 operands on the MXU, f32 accumulate
    h = jnp.dot(x_ref[...], w1_ref[...], preferred_element_type=jnp.float32)
    # block 1: nn.ReLU()  — bias add fused with ReLU on the VPU (f32)
    h = jnp.maximum(h + b1_ref[...], 0.0)
    # block 2: nn.Linear(hidden, out) — cast activations back to bf16 for MXU
    y = jnp.dot(h.astype(jnp.bfloat16), w2_ref[...],
                preferred_element_type=jnp.float32)
    o_ref[...] = (y + b2_ref[...]).astype(o_ref.dtype)


def _round_up(n, m):
    return ((n + m - 1) // m) * m


def my_sequential_forward(x, w1, b1, w2, b2, *, tile_b=1024):
    """Fused forward of MySequential(Linear, ReLU, Linear) as one pallas_call.

    x : (B, D_in) f32   w1: (D_in, H) f32   b1: (1, H) f32
    w2: (H, D_out) f32  b2: (1, D_out) f32
    returns (B, D_out) f32
    """
    B, d_in = x.shape
    hidden = w1.shape[1]
    d_out = w2.shape[1]

    # bf16 operands for the MXU; biases / accumulation stay f32.
    xb = x.astype(jnp.bfloat16)
    w1b = w1.astype(jnp.bfloat16)
    w2b = w2.astype(jnp.bfloat16)

    # Batch tile: big (default 1024) but clamped to the (16-aligned) batch so
    # small batches still run with a single grid step. Pad B up to the grid.
    tile_b = min(tile_b, _round_up(B, 16))
    B_pad = _round_up(B, tile_b)
    if B_pad != B:
        xb = jnp.pad(xb, ((0, B_pad - B), (0, 0)))
    grid = (B_pad // tile_b,)

    resident = lambda i: (0, 0)  # weights / biases: same block every grid step

    cost = pl.CostEstimate(
        flops=2 * B_pad * (d_in * hidden + hidden * d_out),
        transcendentals=0,
        bytes_accessed=(xb.size * 2 + w1b.size * 2 + w2b.size * 2
                        + b1.size * 4 + b2.size * 4 + B_pad * d_out * 4),
    )

    out = pl.pallas_call(
        _mlp_kernel,
        out_shape=jax.ShapeDtypeStruct((B_pad, d_out), jnp.float32),
        grid=grid,
        in_specs=[
            pl.BlockSpec((tile_b, d_in), lambda i: (i, 0)),   # x: batch-tiled
            pl.BlockSpec((d_in, hidden), resident),           # W1: resident
            pl.BlockSpec((1, hidden), resident),              # b1: resident
            pl.BlockSpec((hidden, d_out), resident),          # W2: resident
            pl.BlockSpec((1, d_out), resident),               # b2: resident
        ],
        out_specs=pl.BlockSpec((tile_b, d_out), lambda i: (i, 0)),
        compiler_params=pltpu.CompilerParams(
            dimension_semantics=("parallel",)),                # 2 TCs on v7x
        cost_estimate=cost,
    )(xb, w1b, b1, w2b, b2)

    return out[:B] if B_pad != B else out


# --------------------------- parameter setup (glue) --------------------------
def init_linear_params(key, fan_in, fan_out):
    """Mimics torch.nn.Linear default init (uniform +-1/sqrt(fan_in)).

    Weight is stored as (fan_in, fan_out) so the kernel does x @ W directly
    (PyTorch stores (fan_out, fan_in) and computes x @ W.T).
    """
    kw, kb = jax.random.split(key)
    bound = 1.0 / jnp.sqrt(jnp.float32(fan_in))
    w = jax.random.uniform(kw, (fan_in, fan_out), jnp.float32, -bound, bound)
    b = jax.random.uniform(kb, (1, fan_out), jnp.float32, -bound, bound)
    return w, b


# ---------------------------------- main -------------------------------------
if __name__ == "__main__":
    # MySequential(nn.Linear(20, 256), nn.ReLU(), nn.Linear(256, 10))
    batch, d_in, hidden, d_out = 8, 20, 256, 10

    key = jax.random.PRNGKey(0)
    kx, k1, k2 = jax.random.split(key, 3)

    x = jax.random.normal(kx, (batch, d_in), jnp.float32)
    w1, b1 = init_linear_params(k1, d_in, hidden)
    w2, b2 = init_linear_params(k2, hidden, d_out)

    out = jax.block_until_ready(my_sequential_forward(x, w1, b1, w2, b2))
    assert out.shape == (batch, d_out)

    # Reference with identical bf16-operand / f32-accumulate math (tight check).
    xb, w1b, w2b = (a.astype(jnp.bfloat16) for a in (x, w1, w2))
    h_ref = jnp.maximum(
        jnp.dot(xb, w1b, preferred_element_type=jnp.float32) + b1, 0.0)
    ref = jnp.dot(h_ref.astype(jnp.bfloat16), w2b,
                  preferred_element_type=jnp.float32) + b2
    assert jnp.allclose(out, ref, atol=1e-4, rtol=1e-4), "mismatch vs bf16 reference"

    # Loose sanity check against the full-f32 sequential forward.
    ref32 = jnp.maximum(x @ w1 + b1, 0.0) @ w2 + b2
    assert jnp.allclose(out, ref32, atol=5e-2, rtol=5e-2), "drift vs f32 reference"

    print("KERNEL_OK")
</pallas_src>

<mosaic_0001>
module attributes {stable_mosaic.version = 11 : i64} {
  func.func @_mlp_kernel(%arg0: i32, %arg1: memref<16x20xbf16, #tpu.memory_space<vmem>>, %arg2: memref<20x256xbf16, #tpu.memory_space<vmem>>, %arg3: memref<1x256xf32, #tpu.memory_space<vmem>>, %arg4: memref<256x10xbf16, #tpu.memory_space<vmem>>, %arg5: memref<1x10xf32, #tpu.memory_space<vmem>>, %arg6: memref<16x10xf32, #tpu.memory_space<vmem>>) attributes {dimension_semantics = [#tpu.dimension_semantics<parallel>], iteration_bounds = array<i64: 1>, scalar_prefetch = 0 : i64, scratch_operands = 0 : i64, tpu.core_type = #tpu.core_type<tc>, window_params = [{transform_indices = @transform_0, window_bounds = array<i64: 16, 20>}, {pipeline_mode = #tpu.pipeline_mode<synchronous>, transform_indices = @transform_1, window_bounds = array<i64: 20, 256>}, {pipeline_mode = #tpu.pipeline_mode<synchronous>, transform_indices = @transform_2, window_bounds = array<i64: 1, 256>}, {pipeline_mode = #tpu.pipeline_mode<synchronous>, transform_indices = @transform_3, window_bounds = array<i64: 256, 10>}, {pipeline_mode = #tpu.pipeline_mode<synchronous>, transform_indices = @transform_4, window_bounds = array<i64: 1, 10>}, {transform_indices = @transform_5, window_bounds = array<i64: 16, 10>}]} {
    %c0 = arith.constant 0 : index
    %c0_0 = arith.constant 0 : index
    %0 = vector.load %arg1[%c0, %c0_0] : memref<16x20xbf16, #tpu.memory_space<vmem>>, vector<16x20xbf16>
    %c0_1 = arith.constant 0 : index
    %c0_2 = arith.constant 0 : index
    %1 = vector.load %arg2[%c0_1, %c0_2] : memref<20x256xbf16, #tpu.memory_space<vmem>>, vector<20x256xbf16>
    %cst = arith.constant dense<0.000000e+00> : vector<16x256xf32>
    %2 = tpu.matmul %0, %1, %cst {dimension_numbers = #tpu.dot_dimension_numbers<[1], [0], [0], [1], [0, 0, 1, 1], [], []>} : vector<16x20xbf16>, vector<20x256xbf16>, vector<16x256xf32> -> vector<16x256xf32>
    %c0_3 = arith.constant 0 : index
    %c0_4 = arith.constant 0 : index
    %3 = vector.load %arg3[%c0_3, %c0_4] : memref<1x256xf32, #tpu.memory_space<vmem>>, vector<1x256xf32>
    %4 = vector.broadcast %3 : vector<1x256xf32> to vector<16x256xf32>
    %5 = arith.addf %2, %4 : vector<16x256xf32>
    %cst_5 = arith.constant 0.000000e+00 : f32
    %6 = vector.broadcast %cst_5 : f32 to vector<16x256xf32>
    %7 = arith.maximumf %5, %6 : vector<16x256xf32>
    %8 = arith.truncf %7 : vector<16x256xf32> to vector<16x256xbf16>
    %c0_6 = arith.constant 0 : index
    %c0_7 = arith.constant 0 : index
    %9 = vector.load %arg4[%c0_6, %c0_7] : memref<256x10xbf16, #tpu.memory_space<vmem>>, vector<256x10xbf16>
    %cst_8 = arith.constant dense<0.000000e+00> : vector<16x10xf32>
    %10 = tpu.matmul %8, %9, %cst_8 {dimension_numbers = #tpu.dot_dimension_numbers<[1], [0], [0], [1], [0, 0, 1, 1], [], []>} : vector<16x256xbf16>, vector<256x10xbf16>, vector<16x10xf32> -> vector<16x10xf32>
    %c0_9 = arith.constant 0 : index
    %c0_10 = arith.constant 0 : index
    %11 = vector.load %arg5[%c0_9, %c0_10] : memref<1x10xf32, #tpu.memory_space<vmem>>, vector<1x10xf32>
    %12 = vector.broadcast %11 : vector<1x10xf32> to vector<16x10xf32>
    %13 = arith.addf %10, %12 : vector<16x10xf32>
    %c0_11 = arith.constant 0 : index
    %c0_12 = arith.constant 0 : index
    %14 = vector.load %arg6[%c0_11, %c0_12] : memref<16x10xf32, #tpu.memory_space<vmem>>, vector<16x10xf32>
    tpu.vector_store %arg6[%c0_11, %c0_12], %13 {strides = array<i32>} : memref<16x10xf32, #tpu.memory_space<vmem>>, vector<16x10xf32>,
    return
  }
  func.func @transform_0(%arg0: i32) -> (i32, i32) {
    %c0_i32 = arith.constant 0 : i32
    %c0_i32_0 = arith.constant 0 : i32
    return %arg0, %c0_i32 : i32, i32
  }
  func.func @transform_1(%arg0: i32) -> (i32, i32) {
    %c0_i32 = arith.constant 0 : i32
    %c0_i32_0 = arith.constant 0 : i32
    %c0_i32_1 = arith.constant 0 : i32
    return %c0_i32, %c0_i32_0 : i32, i32
  }
  func.func @transform_2(%arg0: i32) -> (i32, i32) {
    %c0_i32 = arith.constant 0 : i32
    %c0_i32_0 = arith.constant 0 : i32
    %c0_i32_1 = arith.constant 0 : i32
    return %c0_i32, %c0_i32_0 : i32, i32
  }
  func.func @transform_3(%arg0: i32) -> (i32, i32) {
    %c0_i32 = arith.constant 0 : i32
    %c0_i32_0 = arith.constant 0 : i32
    %c0_i32_1 = arith.constant 0 : i32
    return %c0_i32, %c0_i32_0 : i32, i32
  }
  func.func @transform_4(%arg0: i32) -> (i32, i32) {
    %c0_i32 = arith.constant 0 : i32
    %c0_i32_0 = arith.constant 0 : i32
    %c0_i32_1 = arith.constant 0 : i32
    return %c0_i32, %c0_i32_0 : i32, i32
  }
  func.func @transform_5(%arg0: i32) -> (i32, i32) {
    %c0_i32 = arith.constant 0 : i32
    %c0_i32_0 = arith.constant 0 : i32
    return %arg0, %c0_i32 : i32, i32
  }
}

</mosaic_0001>

<llo_original>
// kernel: tpu_custom_call.1
$region0: #{tpu_custom_call.1}
  #allocation0 [shape = 'u32[]', space=smem, size = 0x4, offset = 0x4, fixed_abs, tag = 'smem constant byte address 0x4 - core index']
  #allocation1 [shape = 'u32[72,128]{1,0:T(1,128)}', space=vmem, size = 0x9000, scoped, tag = 'internal scratch']
  %s0 = inlined_call_operand.vmem [shape: bf16[16,20], index: 0, kind: input, shape index: {}]
  %s1 = inlined_call_operand.vmem [shape: bf16[20,256], index: 1, kind: input, shape index: {}]
  %s2 = inlined_call_operand.vmem [shape: f32[1,256], index: 2, kind: input, shape index: {}]
  %s3 = inlined_call_operand.vmem [shape: bf16[256,10], index: 3, kind: input, shape index: {}]
  %s4 = inlined_call_operand.vmem [shape: f32[1,10], index: 4, kind: input, shape index: {}]
  %s5 = inlined_call_operand.hbm [shape: f32[16,10], index: 5, kind: output, shape index: {}]
  %s6 = sld [smem:[#allocation0]]
  $region30: #{tpu_custom_call.1} parent=0
    _
  %s8 = ssub.s32 1, %s6
  %s9 = scalar_select 0, %s8, %s6
  $region1: #{tpu_custom_call.1} parent=0
    #allocation2 [shape = 'u8[8192]{0}', space=vmem, size = 0x2000, scoped, tag = 'output window, operand 0, single buffered']
    #allocation3 [shape = 's32[1]{0}', space=sflag, size = 0x4, scoped, tag = 'scoped memory for tpu_custom_call.1']
    %10 = vsyncpa [#allocation3], 0
    // Predicated region
    $region2: #{tpu_custom_call.1} parent=1 // pred_check
      _
    $region3: #{tpu_custom_call.1} parent=1 // pred_check_branch
      %12 = sbr.rel (0) target = $region5
    $region4: #{tpu_custom_call.1} parent=1 // pred_region
      _
    $region5: #{tpu_custom_call.1} parent=1 // pred_fallthru
      _
    // Predicated region
    $region6: #{tpu_custom_call.1} parent=1 // pred_check
      _
    $region7: #{tpu_custom_call.1} parent=1 // pred_check_branch
      %14 = sbr.rel (0) target = $region9
    $region8: #{tpu_custom_call.1} parent=1 // pred_region
      _
    $region9: #{tpu_custom_call.1} parent=1 // pred_fallthru
      _
    // Predicated region
    $region10: #{tpu_custom_call.1} parent=1 // pred_check
      _
    $region11: #{tpu_custom_call.1} parent=1 // pred_check_branch
      %16 = sbr.rel (0) target = $region13
    $region12: #{tpu_custom_call.1} parent=1 // pred_region
      _
    $region13: #{tpu_custom_call.1} parent=1 // pred_fallthru
      _
    // Predicated region
    $region14: #{tpu_custom_call.1} parent=1 // pred_check
      _
    $region15: #{tpu_custom_call.1} parent=1 // pred_check_branch
      %18 = sbr.rel (0) target = $region17
    $region16: #{tpu_custom_call.1} parent=1 // pred_region
      _
    $region17: #{tpu_custom_call.1} parent=1 // pred_fallthru
      _
    // Predicated region
    $region18: #{tpu_custom_call.1} parent=1 // pred_check
      _
    $region19: #{tpu_custom_call.1} parent=1 // pred_check_branch
      %20 = sbr.rel (0) target = $region21
    $region20: #{tpu_custom_call.1} parent=1 // pred_region
      _
    $region21: #{tpu_custom_call.1} parent=1 // pred_fallthru
      _
    %v22 = vld [vmem:[%s0] sm:$0xf]
    %v23 = vld [vmem:[%s0 + $0x4] sm:$0xf]
    %v24 = vld [vmem:[%s1] sm:$0xff]
    %v25 = vld [vmem:[%s1 + $0x8] sm:$0xff]
    %v26 = vld [vmem:[%s1 + $0x10] sm:$0x33]
    %v27 = vld [vmem:[%s2] sm:$0x3]
    %v29 = vperm.slane %v27, 0
    %v30 = vperm.slane %v27, 1
    %v35 = vunpack.c.l.b16 %v22
    %v36 = vunpack.c.l.b16 %v23
    %v37 = vpack.c.b16 %v36, %v35
    %v41 = vunpack.c.l.b16 %v24
    %v42 = vunpack.c.h.b16 %v24
    %v43 = vunpack.c.l.b16 %v25
    %v44 = vunpack.c.h.b16 %v25
    %v45 = vunpack.c.l.b16 %v26
    %v46 = vunpack.c.h.b16 %v26
    %v47 = vpack.c.b16 %v43, %v41
    %v48 = vpack.c.b16 %v44, %v42
    %v49 = vpack.c.b16 %v45, %v45
    %v50 = vpack.c.b16 %v46, %v46
    %vm53 = vcmask 162816
    %v55 = vsel %vm53, %v37, 0
    %vm57 = vcmask 1041408
    %v59 = vsel %vm57, %v49, 0
    %v62 = vsel %vm57, %v50, 0
    %64 = vmatpush.bf16.msra.mxu0 0
    %65 = vmatpush.bf16.msra.mxu0 0
    %66 = vmatpush.bf16.msra.mxu0 0
    %67 = vmatpush.bf16.msra.mxu0 0
    %68 = vmatpush.bf16.msra.mxu0 0
    %69 = vmatpush.bf16.msra.mxu0 0
    %70 = vmatpush.bf16.msra.mxu0 %v59
    %71 = vmatpush.bf16.msra.mxu0 %v47
    %72 = vmatmul.bf16.gmra.mxu0 %v55
    %v73 = vpop.f32.mrf.mxu0
    %v74 = vadd.f32 %v29, %v73
    %v75 = vpop.f32.mrf.mxu0
    %v76 = vadd.f32 %v29, %v75
    %77 = vdwg.mxu0
    %78 = vmatpush.bf16.msra.mxu0 0
    %79 = vmatpush.bf16.msra.mxu0 0
    %80 = vmatpush.bf16.msra.mxu0 0
    %81 = vmatpush.bf16.msra.mxu0 0
    %82 = vmatpush.bf16.msra.mxu0 0
    %83 = vmatpush.bf16.msra.mxu0 0
    %84 = vmatpush.bf16.msra.mxu0 %v62
    %85 = vmatpush.bf16.msra.mxu0 %v48
    %86 = vmatmul.bf16.gmra.mxu0 %v55
    %v87 = vpop.f32.mrf.mxu0
    %v88 = vadd.f32 %v30, %v87
    %v89 = vpop.f32.mrf.mxu0
    %v90 = vadd.f32 %v30, %v89
    %91 = vdwg.mxu0
    %v92 = vmax.f32 %v74, 0.0
    %v93 = vmax.f32 %v88, 0.0
    %v94 = vmax.f32 %v76, 0.0
    %v95 = vmax.f32 %v90, 0.0
    %v96 = vpack.c.bf16 %v94, %v92
    %v97 = vpack.c.bf16 %v95, %v93
    %v98 = vld [vmem:[%s3] sm:$0xf]
    %v99 = vld [vmem:[%s3 + $0x4] sm:$0xf]
    %v100 = vld [vmem:[%s3 + $0x8] sm:$0xf]
    %v101 = vld [vmem:[%s3 + $0xc] sm:$0xf]
    %v102 = vld [vmem:[%s3 + $0x10] sm:$0xf]
    %v103 = vld [vmem:[%s3 + $0x14] sm:$0xf]
    %v104 = vld [vmem:[%s3 + $0x18] sm:$0xf]
    %v105 = vld [vmem:[%s3 + $0x1c] sm:$0xf]
    %v106 = vld [vmem:[%s3 + $0x20] sm:$0xf]
    %v107 = vld [vmem:[%s3 + $0x24] sm:$0xf]
    %v108 = vld [vmem:[%s3 + $0x28] sm:$0xf]
    %v109 = vld [vmem:[%s3 + $0x2c] sm:$0xf]
    %v110 = vld [vmem:[%s3 + $0x30] sm:$0xf]
    %v111 = vld [vmem:[%s3 + $0x34] sm:$0xf]
    %v112 = vld [vmem:[%s3 + $0x38] sm:$0xf]
    %v113 = vld [vmem:[%s3 + $0x3c] sm:$0xf]
    %v114 = vld [vmem:[%s3 + $0x40] sm:$0xf]
    %v115 = vld [vmem:[%s3 + $0x44] sm:$0xf]
    %v116 = vld [vmem:[%s3 + $0x48] sm:$0xf]
    %v117 = vld [vmem:[%s3 + $0x4c] sm:$0xf]
    %v118 = vld [vmem:[%s3 + $0x50] sm:$0xf]
    %v119 = vld [vmem:[%s3 + $0x54] sm:$0xf]
    %v120 = vld [vmem:[%s3 + $0x58] sm:$0xf]
    %v121 = vld [vmem:[%s3 + $0x5c] sm:$0xf]
    %v122 = vld [vmem:[%s3 + $0x60] sm:$0xf]
    %v123 = vld [vmem:[%s3 + $0x64] sm:$0xf]
    %v124 = vld [vmem:[%s3 + $0x68] sm:$0xf]
    %v125 = vld [vmem:[%s3 + $0x6c] sm:$0xf]
    %v126 = vld [vmem:[%s3 + $0x70] sm:$0xf]
    %v127 = vld [vmem:[%s3 + $0x74] sm:$0xf]
    %v128 = vld [vmem:[%s3 + $0x78] sm:$0xf]
    %v129 = vld [vmem:[%s3 + $0x7c] sm:$0xf]
    %v130 = vld [vmem:[%s4] sm:$0x1]
    %v132 = vperm.slane %v130, 0
    %v166 = vunpack.c.l.b16 %v98
    %v167 = vunpack.c.l.b16 %v99
    %v168 = vunpack.c.l.b16 %v100
    %v169 = vunpack.c.l.b16 %v101
    %v170 = vunpack.c.l.b16 %v102
    %v171 = vunpack.c.l.b16 %v103
    %v172 = vunpack.c.l.b16 %v104
    %v173 = vunpack.c.l.b16 %v105
    %v174 = vunpack.c.l.b16 %v106
    %v175 = vunpack.c.l.b16 %v107
    %v176 = vunpack.c.l.b16 %v108
    %v177 = vunpack.c.l.b16 %v109
    %v178 = vunpack.c.l.b16 %v110
    %v179 = vunpack.c.l.b16 %v111
    %v180 = vunpack.c.l.b16 %v112
    %v181 = vunpack.c.l.b16 %v113
    %v182 = vunpack.c.l.b16 %v114
    %v183 = vunpack.c.l.b16 %v115
    %v184 = vunpack.c.l.b16 %v116
    %v185 = vunpack.c.l.b16 %v117
    %v186 = vunpack.c.l.b16 %v118
    %v187 = vunpack.c.l.b16 %v119
    %v188 = vunpack.c.l.b16 %v120
    %v189 = vunpack.c.l.b16 %v121
    %v190 = vunpack.c.l.b16 %v122
    %v191 = vunpack.c.l.b16 %v123
    %v192 = vunpack.c.l.b16 %v124
    %v193 = vunpack.c.l.b16 %v125
    %v194 = vunpack.c.l.b16 %v126
    %v195 = vunpack.c.l.b16 %v127
    %v196 = vunpack.c.l.b16 %v128
    %v197 = vunpack.c.l.b16 %v129
    %v198 = vpack.c.b16 %v167, %v166
    %v199 = vpack.c.b16 %v169, %v168
    %v200 = vpack.c.b16 %v171, %v170
    %v201 = vpack.c.b16 %v173, %v172
    %v202 = vpack.c.b16 %v175, %v174
    %v203 = vpack.c.b16 %v177, %v176
    %v204 = vpack.c.b16 %v179, %v178
    %v205 = vpack.c.b16 %v181, %v180
    %v206 = vpack.c.b16 %v183, %v182
    %v207 = vpack.c.b16 %v185, %v184
    %v208 = vpack.c.b16 %v187, %v186
    %v209 = vpack.c.b16 %v189, %v188
    %v210 = vpack.c.b16 %v191, %v190
    %v211 = vpack.c.b16 %v193, %v192
    %v212 = vpack.c.b16 %v195, %v194
    %v213 = vpack.c.b16 %v197, %v196
    %230 = vmatpush.bf16.msra.mxu0 %v205
    %231 = vmatpush.bf16.msra.mxu0 %v204
    %232 = vmatpush.bf16.msra.mxu0 %v203
    %233 = vmatpush.bf16.msra.mxu0 %v202
    %234 = vmatpush.bf16.msra.mxu0 %v201
    %235 = vmatpush.bf16.msra.mxu0 %v200
    %236 = vmatpush.bf16.msra.mxu0 %v199
    %237 = vmatpush.bf16.msra.mxu0 %v198
    %238 = vmatmul.bf16.gmra.mxu0 %v96
    %v239 = vpop.f32.mrf.mxu0
    %v240 = vadd.f32 %v132, %v239
    %v241 = vpop.f32.mrf.mxu0
    %v242 = vadd.f32 %v132, %v241
    %243 = vdwg.mxu0
    %244 = vmatpush.bf16.msra.mxu0 %v213
    %245 = vmatpush.bf16.msra.mxu0 %v212
    %246 = vmatpush.bf16.msra.mxu0 %v211
    %247 = vmatpush.bf16.msra.mxu0 %v210
    %248 = vmatpush.bf16.msra.mxu0 %v209
    %249 = vmatpush.bf16.msra.mxu0 %v208
    %250 = vmatpush.bf16.msra.mxu0 %v207
    %251 = vmatpush.bf16.msra.mxu0 %v206
    %252 = vmatmul.bf16.gmra.mxu0 %v97
    %v253 = vpop.f32.mrf.mxu0
    %v254 = vadd.f32 %v240, %v253
    %v255 = vpop.f32.mrf.mxu0
    %v256 = vadd.f32 %v242, %v255
    %257 = vdwg.mxu0
    %vm258 = vcmask 80896
    %259 = vst.msk [vmem:[#allocation2] sm:$0xff] %vm258, %v254
    %260 = vst.msk [vmem:[#allocation2 + $0x8] sm:$0xff] %vm258, %v256
    // Predicated region
    $region22: #{tpu_custom_call.1} parent=1 // pred_check
      _
    $region23: #{tpu_custom_call.1} parent=1 // pred_check_branch
      %262 = sbr.rel (0) target = $region25
    $region24: #{tpu_custom_call.1} parent=1 // pred_region
      %264 = vsyncadd [#allocation3], 0
      %s265 = sshll.u32 [#allocation2], 4
      %s266 = int_to_ptr.vmem [resolvable:$true] %s265
      %s267 = sshll.u32 %s5, 4
      %s268 = int_to_ptr.hbm [resolvable:$true] %s267
      %273 = dma.vmem_to_hbm [thread:$0]  %s266, 256, %s268, [#allocation3], 128, 128, 8
    $region25: #{tpu_custom_call.1} parent=1 // pred_fallthru
      _
    // Predicated region
    $region26: #{tpu_custom_call.1} parent=1 // pred_check
      _
    $region27: #{tpu_custom_call.1} parent=1 // pred_check_branch
      %275 = sbr.rel (0) target = $region29
    $region28: #{tpu_custom_call.1} parent=1 // pred_region
      %277 = dma.done [#allocation3], 256
    $region29: #{tpu_custom_call.1} parent=1 // pred_fallthru
      _
    %278 = vsyncpa [#allocation3], 1

</llo_original>
